<compile_context>
chip_gen: v7x
topology: tpu7x:2x2x1
jax: 0.10.0
libtpu: 0.0.40
codegen_flags: <defaults>
</compile_context>

<pallas_src>
import functools

import jax
import jax.numpy as jnp
from jax import lax
from jax.experimental import pallas as pl
from jax.experimental.pallas import tpu as pltpu

LANES = 128
TILE_R = 512           # rows per grid step -> (512, 128) f32 tile = 256 KiB / input
NUM_SUMS = 6           # [p*m, p, m, p*m*w, (p+m)*w, bce(p*m, m)]


def _tile_partial_sum(x):
    """(R, 128) -> (8, 128) via a pairwise tree of aligned vreg adds (R % 8 == 0)."""
    parts = [x[8 * j:8 * (j + 1), :] for j in range(x.shape[0] // 8)]
    while len(parts) > 1:
        mid = (len(parts) + 1) // 2
        parts = [
            parts[j] + parts[mid + j] if mid + j < len(parts) else parts[j]
            for j in range(mid)
        ]
    return parts[0]


def _fused_sums_kernel(p_ref, m_ref, w_ref, out_ref, *, rows_total,
                       steps_per_slice):
    c = pl.program_id(0)      # "parallel" slice axis (one per TensorCore on v7x)
    i = pl.program_id(1)      # "arbitrary" streaming/reduction axis

    # The (1, NUM_SUMS, 8, 128) output block is resident across the inner axis.
    @pl.when(i == 0)
    def _():
        out_ref[...] = jnp.zeros_like(out_ref)

    tile_r = p_ref.shape[0]
    # Global tile index; may point past the end of the data for the last slice
    # / remainder tile — those rows are masked out below.
    g = c * steps_per_slice + i
    valid_rows = rows_total - g * tile_r
    row = lax.broadcasted_iota(jnp.int32, (tile_r, LANES), 0)
    valid = row < valid_rows

    # jnp.where (not multiply) so NaN/Inf garbage in out-of-bounds rows cannot
    # leak into the sums.
    p = jnp.where(valid, p_ref[...].astype(jnp.float32), 0.0)
    m = jnp.where(valid, m_ref[...].astype(jnp.float32), 0.0)
    w = jnp.where(valid, w_ref[...].astype(jnp.float32), 0.0)

    pm = p * m
    # BCELoss(p*m, m) with PyTorch's clamp of log() at -100 (reduction='sum').
    log_x = jnp.maximum(jnp.log(pm), -100.0)
    log_1mx = jnp.maximum(jnp.log(1.0 - pm), -100.0)
    bce = -(m * log_x + (1.0 - m) * log_1mx)

    contribs = (pm, p, m, pm * w, (p + m) * w, bce)
    for k, contrib in enumerate(contribs):
        out_ref[0, k] += _tile_partial_sum(contrib)


def _fused_sums(output_2d, mask_2d, index_weight):
    """One Pallas pass over (p, m, w) producing the six global sums (f32)."""
    p = output_2d.reshape(-1)
    m = mask_2d.reshape(-1)
    w = jnp.broadcast_to(index_weight, output_2d.shape).reshape(-1)

    n = p.shape[0]
    block = 8 * LANES
    if n % block != 0:
        # Fallback only: tiny zero-pad to an (8*128)-multiple (zeros contribute
        # nothing to any of the six sums). The common case n % 1024 == 0 takes
        # the zero-copy path with in-kernel masking instead.
        pad = block - n % block
        p = jnp.pad(p, (0, pad))
        m = jnp.pad(m, (0, pad))
        w = jnp.pad(w, (0, pad))

    rows = p.shape[0] // LANES
    p2 = p.reshape(rows, LANES)
    m2 = m.reshape(rows, LANES)
    w2 = w.reshape(rows, LANES)

    tile_r = min(TILE_R, rows)
    n_blocks = pl.cdiv(rows, tile_r)
    num_slices = 2 if n_blocks >= 2 else 1  # both TCs on v7x; harmless on 1-TC chips
    steps = pl.cdiv(n_blocks, num_slices)

    def in_map(c, i):
        # Clamp so a fully-out-of-range step (odd block counts) just re-reads
        # the last valid block; its rows are masked out inside the kernel.
        return (jnp.minimum(c * steps + i, n_blocks - 1), 0)

    in_spec = pl.BlockSpec((tile_r, LANES), in_map)
    kernel = functools.partial(_fused_sums_kernel, rows_total=rows,
                               steps_per_slice=steps)

    partials = pl.pallas_call(
        kernel,
        out_shape=jax.ShapeDtypeStruct((num_slices, NUM_SUMS, 8, LANES),
                                       jnp.float32),
        grid_spec=pltpu.PrefetchScalarGridSpec(
            num_scalar_prefetch=0,
            grid=(num_slices, steps),
            in_specs=[in_spec, in_spec, in_spec],
            out_specs=pl.BlockSpec((1, NUM_SUMS, 8, LANES),
                                   lambda c, i: (c, 0, 0, 0)),
        ),
        compiler_params=pltpu.CompilerParams(
            dimension_semantics=("parallel", "arbitrary")),
    )(p2, m2, w2)

    # Tiny final reduce (num_slices * 6 * 8 * 128 elements) in plain JAX.
    sums = jnp.sum(partials, axis=(0, 2, 3))
    return tuple(sums[k] for k in range(NUM_SUMS))


def rebuild_3d(output_2d, mask_2d, index_weight):
    # TODO(synk): rebuild_3d is external to losses.py (not provided); modeled as
    # the per-element re-weighting implied by the forward's shape usage:
    #   output_2D_weight = (output_2D * index_weight).view(-1)
    #   mask_2D_weight   = (mask_2D   * index_weight).view(-1)
    w = jnp.broadcast_to(index_weight, output_2d.shape)
    return (output_2d * w).reshape(-1), (mask_2d * w).reshape(-1)


def iou_loss_2d_dice_3d_reg(output_2d, mask_2d, index_weight,
                            a=1.0, b=1.0, c=0.1):
    eps = 1e-8
    s_pm, s_p, s_m, s_pmw, s_pw_mw, s_bce = _fused_sums(
        output_2d, mask_2d, index_weight)

    # IoU loss over the 2D prediction.
    intersection1 = s_pm
    union1 = s_p + s_m - s_pm
    iou1 = (intersection1 + eps) / (union1 + eps)
    loss1 = 1.0 - iou1

    # Dice loss over the rebuilt / re-weighted prediction.
    intersection2 = s_pmw                              # Σ output_2D_weight * mask
    dice2 = 2.0 * (intersection2 + eps) / (s_pw_mw + eps)   # den12 + den22
    loss2 = 1.0 - dice2

    # BCE(output_2D * mask_2D, mask_2D) summed, normalized by Σ mask_2D.
    loss_reg = s_bce / s_m

    loss = a * loss1 + b * loss2 + c * loss_reg
    return loss1, loss2, loss


def _reference_loss(output_2d, mask_2d, index_weight, a=1.0, b=1.0, c=0.1):
    """Pure-JAX mirror of the PyTorch forward, for validation."""
    eps = 1e-8
    p = output_2d.astype(jnp.float32)
    m = mask_2d.astype(jnp.float32)
    inter1 = p * m
    intersection1 = inter1.sum()
    union1 = (p + m - inter1).sum()
    iou1 = (intersection1 + eps) / (union1 + eps)
    loss1 = 1.0 - iou1
    pw, mw = rebuild_3d(p, m, index_weight)
    intersection2 = (pw * m.reshape(-1)).sum()
    dice2 = 2.0 * (intersection2 + eps) / (pw.sum() + mw.sum() + eps)
    loss2 = 1.0 - dice2
    x = p * m
    bce = -(m * jnp.maximum(jnp.log(x), -100.0)
            + (1.0 - m) * jnp.maximum(jnp.log(1.0 - x), -100.0))
    loss_reg = bce.sum() / m.sum()
    loss = a * loss1 + b * loss2 + c * loss_reg
    return loss1, loss2, loss


if __name__ == "__main__":
    key = jax.random.PRNGKey(0)
    loss_fn = jax.jit(iou_loss_2d_dice_3d_reg)

    # Small NCHW shape consistent with the module.
    k1, k2, k3 = jax.random.split(key, 3)
    B, C, H, W = 2, 4, 16, 16
    output_2d = jax.nn.sigmoid(jax.random.normal(k1, (B, C, H, W), jnp.float32))
    mask_2d = jax.random.bernoulli(k2, 0.5, (B, C, H, W)).astype(jnp.float32)
    index_weight = jax.random.uniform(k3, (B, C, H, W), dtype=jnp.float32)

    out_small = loss_fn(output_2d, mask_2d, index_weight)
    jax.block_until_ready(out_small)
    ref_small = _reference_loss(output_2d, mask_2d, index_weight)

    # A second shape exercising the multi-tile / two-slice / masked-remainder path.
    k4, k5, k6 = jax.random.split(jax.random.fold_in(key, 1), 3)
    B2, C2, H2, W2 = 2, 4, 96, 128
    output_2d_b = jax.nn.sigmoid(
        jax.random.normal(k4, (B2, C2, H2, W2), jnp.float32))
    mask_2d_b = jax.random.bernoulli(
        k5, 0.5, (B2, C2, H2, W2)).astype(jnp.float32)
    index_weight_b = jax.random.uniform(k6, (B2, C2, H2, W2), dtype=jnp.float32)

    out_big = loss_fn(output_2d_b, mask_2d_b, index_weight_b)
    jax.block_until_ready(out_big)
    ref_big = _reference_loss(output_2d_b, mask_2d_b, index_weight_b)

    for got, want in zip(out_small + out_big, ref_small + ref_big):
        assert jnp.allclose(got, want, rtol=1e-3, atol=1e-3), (got, want)

    print("KERNEL_OK")
</pallas_src>

<mosaic_0001>
module attributes {stable_mosaic.version = 11 : i64} {
  func.func @_fused_sums_kernel(%arg0: i32, %arg1: i32, %arg2: memref<16x128xf32, #tpu.memory_space<vmem>>, %arg3: memref<16x128xf32, #tpu.memory_space<vmem>>, %arg4: memref<16x128xf32, #tpu.memory_space<vmem>>, %arg5: memref<1x6x8x128xf32, #tpu.memory_space<vmem>>) attributes {dimension_semantics = [#tpu.dimension_semantics<parallel>, #tpu.dimension_semantics<arbitrary>], iteration_bounds = array<i64: 1, 1>, scalar_prefetch = 0 : i64, scratch_operands = 0 : i64, tpu.core_type = #tpu.core_type<tc>, window_params = [{transform_indices = @transform_0, window_bounds = array<i64: 16, 128>}, {transform_indices = @transform_1, window_bounds = array<i64: 16, 128>}, {transform_indices = @transform_2, window_bounds = array<i64: 16, 128>}, {transform_indices = @transform_3, window_bounds = array<i64: 1, 6, 8, 128>}]} {
    %c0_i32 = arith.constant 0 : i32
    %0 = arith.cmpi eq, %arg1, %c0_i32 : i32
    %1 = arith.extui %0 : i1 to i32
    %c0_i32_0 = arith.constant 0 : i32
    %2 = arith.cmpi ne, %1, %c0_i32_0 : i32
    scf.if %2 {
      %cst_57 = arith.constant 0.000000e+00 : f32
      %92 = vector.broadcast %cst_57 : f32 to vector<1x6x8x128xf32>
      %c0_58 = arith.constant 0 : index
      %c0_59 = arith.constant 0 : index
      %c0_60 = arith.constant 0 : index
      %c0_61 = arith.constant 0 : index
      %93 = vector.load %arg5[%c0_58, %c0_59, %c0_60, %c0_61] : memref<1x6x8x128xf32, #tpu.memory_space<vmem>>, vector<1x6x8x128xf32>
      tpu.vector_store %arg5[%c0_58, %c0_59, %c0_60, %c0_61], %92 {strides = array<i32>} : memref<1x6x8x128xf32, #tpu.memory_space<vmem>>, vector<1x6x8x128xf32>,
    } else {
    }
    %c1_i32 = arith.constant 1 : i32
    %3 = arith.muli %arg0, %c1_i32 : i32
    %4 = arith.addi %3, %arg1 : i32
    %c16_i32 = arith.constant 16 : i32
    %5 = arith.muli %4, %c16_i32 : i32
    %c16_i32_1 = arith.constant 16 : i32
    %6 = arith.subi %c16_i32_1, %5 : i32
    %7 = tpu.iota {dimensions = array<i32: 0>} : vector<16x128xi32>
    %8 = vector.broadcast %6 : i32 to vector<16x128xi32>
    %9 = arith.cmpi slt, %7, %8 : vector<16x128xi32>
    %c0 = arith.constant 0 : index
    %c0_2 = arith.constant 0 : index
    %10 = vector.load %arg2[%c0, %c0_2] : memref<16x128xf32, #tpu.memory_space<vmem>>, vector<16x128xf32>
    %cst = arith.constant 0.000000e+00 : f32
    %11 = vector.broadcast %cst : f32 to vector<16x128xf32>
    %12 = arith.select %9, %10, %11 : vector<16x128xi1>, vector<16x128xf32>
    %c0_3 = arith.constant 0 : index
    %c0_4 = arith.constant 0 : index
    %13 = vector.load %arg3[%c0_3, %c0_4] : memref<16x128xf32, #tpu.memory_space<vmem>>, vector<16x128xf32>
    %cst_5 = arith.constant 0.000000e+00 : f32
    %14 = vector.broadcast %cst_5 : f32 to vector<16x128xf32>
    %15 = arith.select %9, %13, %14 : vector<16x128xi1>, vector<16x128xf32>
    %c0_6 = arith.constant 0 : index
    %c0_7 = arith.constant 0 : index
    %16 = vector.load %arg4[%c0_6, %c0_7] : memref<16x128xf32, #tpu.memory_space<vmem>>, vector<16x128xf32>
    %cst_8 = arith.constant 0.000000e+00 : f32
    %17 = vector.broadcast %cst_8 : f32 to vector<16x128xf32>
    %18 = arith.select %9, %16, %17 : vector<16x128xi1>, vector<16x128xf32>
    %19 = arith.mulf %12, %15 : vector<16x128xf32>
    %20 = math.log %19 : vector<16x128xf32>
    %cst_9 = arith.constant -1.000000e+02 : f32
    %21 = vector.broadcast %cst_9 : f32 to vector<16x128xf32>
    %22 = arith.maximumf %20, %21 : vector<16x128xf32>
    %cst_10 = arith.constant 1.000000e+00 : f32
    %23 = vector.broadcast %cst_10 : f32 to vector<16x128xf32>
    %24 = arith.subf %23, %19 : vector<16x128xf32>
    %25 = math.log %24 : vector<16x128xf32>
    %cst_11 = arith.constant -1.000000e+02 : f32
    %26 = vector.broadcast %cst_11 : f32 to vector<16x128xf32>
    %27 = arith.maximumf %25, %26 : vector<16x128xf32>
    %28 = arith.mulf %15, %22 : vector<16x128xf32>
    %cst_12 = arith.constant 1.000000e+00 : f32
    %29 = vector.broadcast %cst_12 : f32 to vector<16x128xf32>
    %30 = arith.subf %29, %15 : vector<16x128xf32>
    %31 = arith.mulf %30, %27 : vector<16x128xf32>
    %32 = arith.addf %28, %31 : vector<16x128xf32>
    %cst_13 = arith.constant 0.000000e+00 : f32
    %33 = vector.broadcast %cst_13 : f32 to vector<16x128xf32>
    %34 = arith.subf %33, %32 : vector<16x128xf32>
    %35 = arith.mulf %19, %18 : vector<16x128xf32>
    %36 = arith.addf %12, %15 : vector<16x128xf32>
    %37 = arith.mulf %36, %18 : vector<16x128xf32>
    %c0_14 = arith.constant 0 : index
    %c0_15 = arith.constant 0 : index
    %c0_16 = arith.constant 0 : index
    %c0_17 = arith.constant 0 : index
    %38 = vector.load %arg5[%c0_14, %c0_15, %c0_16, %c0_17] : memref<1x6x8x128xf32, #tpu.memory_space<vmem>>, vector<1x1x8x128xf32>
    %39 = vector.shape_cast %38 : vector<1x1x8x128xf32> to vector<8x128xf32>
    %40 = vector.extract_strided_slice %19 {offsets = [0, 0], sizes = [8, 128], strides = [1, 1]} : vector<16x128xf32> to vector<8x128xf32>
    %41 = vector.extract_strided_slice %19 {offsets = [8, 0], sizes = [8, 128], strides = [1, 1]} : vector<16x128xf32> to vector<8x128xf32>
    %42 = arith.addf %40, %41 : vector<8x128xf32>
    %43 = arith.addf %39, %42 : vector<8x128xf32>
    %c0_18 = arith.constant 0 : index
    %c0_19 = arith.constant 0 : index
    %c0_20 = arith.constant 0 : index
    %c0_21 = arith.constant 0 : index
    %44 = vector.load %arg5[%c0_18, %c0_19, %c0_20, %c0_21] : memref<1x6x8x128xf32, #tpu.memory_space<vmem>>, vector<1x1x8x128xf32>
    %45 = vector.shape_cast %44 : vector<1x1x8x128xf32> to vector<8x128xf32>
    %46 = vector.shape_cast %43 : vector<8x128xf32> to vector<1x1x8x128xf32>
    tpu.vector_store %arg5[%c0_18, %c0_19, %c0_20, %c0_21], %46 {strides = array<i32>} : memref<1x6x8x128xf32, #tpu.memory_space<vmem>>, vector<1x1x8x128xf32>,
    %c0_22 = arith.constant 0 : index
    %c1 = arith.constant 1 : index
    %c0_23 = arith.constant 0 : index
    %c0_24 = arith.constant 0 : index
    %47 = vector.load %arg5[%c0_22, %c1, %c0_23, %c0_24] : memref<1x6x8x128xf32, #tpu.memory_space<vmem>>, vector<1x1x8x128xf32>
    %48 = vector.shape_cast %47 : vector<1x1x8x128xf32> to vector<8x128xf32>
    %49 = vector.extract_strided_slice %12 {offsets = [0, 0], sizes = [8, 128], strides = [1, 1]} : vector<16x128xf32> to vector<8x128xf32>
    %50 = vector.extract_strided_slice %12 {offsets = [8, 0], sizes = [8, 128], strides = [1, 1]} : vector<16x128xf32> to vector<8x128xf32>
    %51 = arith.addf %49, %50 : vector<8x128xf32>
    %52 = arith.addf %48, %51 : vector<8x128xf32>
    %c0_25 = arith.constant 0 : index
    %c1_26 = arith.constant 1 : index
    %c0_27 = arith.constant 0 : index
    %c0_28 = arith.constant 0 : index
    %53 = vector.load %arg5[%c0_25, %c1_26, %c0_27, %c0_28] : memref<1x6x8x128xf32, #tpu.memory_space<vmem>>, vector<1x1x8x128xf32>
    %54 = vector.shape_cast %53 : vector<1x1x8x128xf32> to vector<8x128xf32>
    %55 = vector.shape_cast %52 : vector<8x128xf32> to vector<1x1x8x128xf32>
    tpu.vector_store %arg5[%c0_25, %c1_26, %c0_27, %c0_28], %55 {strides = array<i32>} : memref<1x6x8x128xf32, #tpu.memory_space<vmem>>, vector<1x1x8x128xf32>,
    %c0_29 = arith.constant 0 : index
    %c2 = arith.constant 2 : index
    %c0_30 = arith.constant 0 : index
    %c0_31 = arith.constant 0 : index
    %56 = vector.load %arg5[%c0_29, %c2, %c0_30, %c0_31] : memref<1x6x8x128xf32, #tpu.memory_space<vmem>>, vector<1x1x8x128xf32>
    %57 = vector.shape_cast %56 : vector<1x1x8x128xf32> to vector<8x128xf32>
    %58 = vector.extract_strided_slice %15 {offsets = [0, 0], sizes = [8, 128], strides = [1, 1]} : vector<16x128xf32> to vector<8x128xf32>
    %59 = vector.extract_strided_slice %15 {offsets = [8, 0], sizes = [8, 128], strides = [1, 1]} : vector<16x128xf32> to vector<8x128xf32>
    %60 = arith.addf %58, %59 : vector<8x128xf32>
    %61 = arith.addf %57, %60 : vector<8x128xf32>
    %c0_32 = arith.constant 0 : index
    %c2_33 = arith.constant 2 : index
    %c0_34 = arith.constant 0 : index
    %c0_35 = arith.constant 0 : index
    %62 = vector.load %arg5[%c0_32, %c2_33, %c0_34, %c0_35] : memref<1x6x8x128xf32, #tpu.memory_space<vmem>>, vector<1x1x8x128xf32>
    %63 = vector.shape_cast %62 : vector<1x1x8x128xf32> to vector<8x128xf32>
    %64 = vector.shape_cast %61 : vector<8x128xf32> to vector<1x1x8x128xf32>
    tpu.vector_store %arg5[%c0_32, %c2_33, %c0_34, %c0_35], %64 {strides = array<i32>} : memref<1x6x8x128xf32, #tpu.memory_space<vmem>>, vector<1x1x8x128xf32>,
    %c0_36 = arith.constant 0 : index
    %c3 = arith.constant 3 : index
    %c0_37 = arith.constant 0 : index
    %c0_38 = arith.constant 0 : index
    %65 = vector.load %arg5[%c0_36, %c3, %c0_37, %c0_38] : memref<1x6x8x128xf32, #tpu.memory_space<vmem>>, vector<1x1x8x128xf32>
    %66 = vector.shape_cast %65 : vector<1x1x8x128xf32> to vector<8x128xf32>
    %67 = vector.extract_strided_slice %35 {offsets = [0, 0], sizes = [8, 128], strides = [1, 1]} : vector<16x128xf32> to vector<8x128xf32>
    %68 = vector.extract_strided_slice %35 {offsets = [8, 0], sizes = [8, 128], strides = [1, 1]} : vector<16x128xf32> to vector<8x128xf32>
    %69 = arith.addf %67, %68 : vector<8x128xf32>
    %70 = arith.addf %66, %69 : vector<8x128xf32>
    %c0_39 = arith.constant 0 : index
    %c3_40 = arith.constant 3 : index
    %c0_41 = arith.constant 0 : index
    %c0_42 = arith.constant 0 : index
    %71 = vector.load %arg5[%c0_39, %c3_40, %c0_41, %c0_42] : memref<1x6x8x128xf32, #tpu.memory_space<vmem>>, vector<1x1x8x128xf32>
    %72 = vector.shape_cast %71 : vector<1x1x8x128xf32> to vector<8x128xf32>
    %73 = vector.shape_cast %70 : vector<8x128xf32> to vector<1x1x8x128xf32>
    tpu.vector_store %arg5[%c0_39, %c3_40, %c0_41, %c0_42], %73 {strides = array<i32>} : memref<1x6x8x128xf32, #tpu.memory_space<vmem>>, vector<1x1x8x128xf32>,
    %c0_43 = arith.constant 0 : index
    %c4 = arith.constant 4 : index
    %c0_44 = arith.constant 0 : index
    %c0_45 = arith.constant 0 : index
    %74 = vector.load %arg5[%c0_43, %c4, %c0_44, %c0_45] : memref<1x6x8x128xf32, #tpu.memory_space<vmem>>, vector<1x1x8x128xf32>
    %75 = vector.shape_cast %74 : vector<1x1x8x128xf32> to vector<8x128xf32>
    %76 = vector.extract_strided_slice %37 {offsets = [0, 0], sizes = [8, 128], strides = [1, 1]} : vector<16x128xf32> to vector<8x128xf32>
    %77 = vector.extract_strided_slice %37 {offsets = [8, 0], sizes = [8, 128], strides = [1, 1]} : vector<16x128xf32> to vector<8x128xf32>
    %78 = arith.addf %76, %77 : vector<8x128xf32>
    %79 = arith.addf %75, %78 : vector<8x128xf32>
    %c0_46 = arith.constant 0 : index
    %c4_47 = arith.constant 4 : index
    %c0_48 = arith.constant 0 : index
    %c0_49 = arith.constant 0 : index
    %80 = vector.load %arg5[%c0_46, %c4_47, %c0_48, %c0_49] : memref<1x6x8x128xf32, #tpu.memory_space<vmem>>, vector<1x1x8x128xf32>
    %81 = vector.shape_cast %80 : vector<1x1x8x128xf32> to vector<8x128xf32>
    %82 = vector.shape_cast %79 : vector<8x128xf32> to vector<1x1x8x128xf32>
    tpu.vector_store %arg5[%c0_46, %c4_47, %c0_48, %c0_49], %82 {strides = array<i32>} : memref<1x6x8x128xf32, #tpu.memory_space<vmem>>, vector<1x1x8x128xf32>,
    %c0_50 = arith.constant 0 : index
    %c5 = arith.constant 5 : index
    %c0_51 = arith.constant 0 : index
    %c0_52 = arith.constant 0 : index
    %83 = vector.load %arg5[%c0_50, %c5, %c0_51, %c0_52] : memref<1x6x8x128xf32, #tpu.memory_space<vmem>>, vector<1x1x8x128xf32>
    %84 = vector.shape_cast %83 : vector<1x1x8x128xf32> to vector<8x128xf32>
    %85 = vector.extract_strided_slice %34 {offsets = [0, 0], sizes = [8, 128], strides = [1, 1]} : vector<16x128xf32> to vector<8x128xf32>
    %86 = vector.extract_strided_slice %34 {offsets = [8, 0], sizes = [8, 128], strides = [1, 1]} : vector<16x128xf32> to vector<8x128xf32>
    %87 = arith.addf %85, %86 : vector<8x128xf32>
    %88 = arith.addf %84, %87 : vector<8x128xf32>
    %c0_53 = arith.constant 0 : index
    %c5_54 = arith.constant 5 : index
    %c0_55 = arith.constant 0 : index
    %c0_56 = arith.constant 0 : index
    %89 = vector.load %arg5[%c0_53, %c5_54, %c0_55, %c0_56] : memref<1x6x8x128xf32, #tpu.memory_space<vmem>>, vector<1x1x8x128xf32>
    %90 = vector.shape_cast %89 : vector<1x1x8x128xf32> to vector<8x128xf32>
    %91 = vector.shape_cast %88 : vector<8x128xf32> to vector<1x1x8x128xf32>
    tpu.vector_store %arg5[%c0_53, %c5_54, %c0_55, %c0_56], %91 {strides = array<i32>} : memref<1x6x8x128xf32, #tpu.memory_space<vmem>>, vector<1x1x8x128xf32>,
    return
  }
  func.func @transform_0(%arg0: i32, %arg1: i32) -> (i32, i32) {
    %c1_i32 = arith.constant 1 : i32
    %0 = arith.muli %arg0, %c1_i32 : i32
    %1 = arith.addi %0, %arg1 : i32
    %c0_i32 = arith.constant 0 : i32
    %2 = arith.minsi %1, %c0_i32 : i32
    %c0_i32_0 = arith.constant 0 : i32
    %c0_i32_1 = arith.constant 0 : i32
    return %2, %c0_i32_0 : i32, i32
  }
  func.func @transform_1(%arg0: i32, %arg1: i32) -> (i32, i32) {
    %c1_i32 = arith.constant 1 : i32
    %0 = arith.muli %arg0, %c1_i32 : i32
    %1 = arith.addi %0, %arg1 : i32
    %c0_i32 = arith.constant 0 : i32
    %2 = arith.minsi %1, %c0_i32 : i32
    %c0_i32_0 = arith.constant 0 : i32
    %c0_i32_1 = arith.constant 0 : i32
    return %2, %c0_i32_0 : i32, i32
  }
  func.func @transform_2(%arg0: i32, %arg1: i32) -> (i32, i32) {
    %c1_i32 = arith.constant 1 : i32
    %0 = arith.muli %arg0, %c1_i32 : i32
    %1 = arith.addi %0, %arg1 : i32
    %c0_i32 = arith.constant 0 : i32
    %2 = arith.minsi %1, %c0_i32 : i32
    %c0_i32_0 = arith.constant 0 : i32
    %c0_i32_1 = arith.constant 0 : i32
    return %2, %c0_i32_0 : i32, i32
  }
  func.func @transform_3(%arg0: i32, %arg1: i32) -> (i32, i32, i32, i32) {
    %c0_i32 = arith.constant 0 : i32
    %c0_i32_0 = arith.constant 0 : i32
    %c0_i32_1 = arith.constant 0 : i32
    %c0_i32_2 = arith.constant 0 : i32
    return %arg0, %c0_i32, %c0_i32_0, %c0_i32_1 : i32, i32, i32, i32
  }
}

</mosaic_0001>

<llo_original>
// kernel: iou_loss_2d_dice_3d_reg.1
$region0: #{iou_loss_2d_dice_3d_reg.1}
  #allocation0 [shape = 'u32[]', space=smem, size = 0x4, offset = 0x4, fixed_abs, tag = 'smem constant byte address 0x4 - core index']
  #allocation1 [shape = 'u32[144,128]{1,0:T(1,128)}', space=vmem, size = 0x12000, scoped, tag = 'internal scratch']
  %s0 = inlined_call_operand.vmem [shape: f32[16,128], index: 0, kind: input, shape index: {}]
  %s1 = inlined_call_operand.vmem [shape: f32[16,128], index: 1, kind: input, shape index: {}]
  %s2 = inlined_call_operand.vmem [shape: f32[16,128], index: 2, kind: input, shape index: {}]
  %s3 = inlined_call_operand.vmem [shape: f32[1,6,8,128], index: 3, kind: output, shape index: {}]
  %s4 = sld [smem:[#allocation0]]
  $region26: #{iou_loss_2d_dice_3d_reg.1} parent=0
    _
  %s6 = ssub.s32 1, %s4
  %s7 = scalar_select 0, %s6, %s4
  // Predicated region
  $region2: #{iou_loss_2d_dice_3d_reg.1} parent=0 // pred_check
    _
  $region3: #{iou_loss_2d_dice_3d_reg.1} parent=0 // pred_check_branch
    %9 = sbr.rel (0) target = $region5
  $region4: #{iou_loss_2d_dice_3d_reg.1} parent=0 // pred_region
    %s10 = sadd.s32 0, 0
    %p11 = scmp.lt.s32.totalorder %s10, 0
    %s12 = scalar_select %p11, %s10, 0
    %s13 = smul.u32 2, %s12
    %p14 = scmp.lt.s32.totalorder %s13, 1
    %s15 = scalar_select %p14, %s13, 1
    %s16 = smul.addr %s15, 8
    %s17 = scalar_lea.vmem %s0, %s16
    %s18 = sadd.s32 0, 0
    %p19 = scmp.lt.s32.totalorder %s18, 0
    %s20 = scalar_select %p19, %s18, 0
    %s21 = smul.u32 2, %s20
  $region5: #{iou_loss_2d_dice_3d_reg.1} parent=0 // pred_fallthru
    _
  // Predicated region
  $region6: #{iou_loss_2d_dice_3d_reg.1} parent=0 // pred_check
    _
  $region7: #{iou_loss_2d_dice_3d_reg.1} parent=0 // pred_check_branch
    %23 = sbr.rel (0) target = $region9
  $region8: #{iou_loss_2d_dice_3d_reg.1} parent=0 // pred_region
    %s24 = sadd.s32 0, 0
    %p25 = scmp.lt.s32.totalorder %s24, 0
    %s26 = scalar_select %p25, %s24, 0
    %s27 = smul.u32 2, %s26
    %p28 = scmp.lt.s32.totalorder %s27, 1
    %s29 = scalar_select %p28, %s27, 1
    %s30 = smul.addr %s29, 8
    %s31 = scalar_lea.vmem %s1, %s30
    %s32 = sadd.s32 0, 0
    %p33 = scmp.lt.s32.totalorder %s32, 0
    %s34 = scalar_select %p33, %s32, 0
    %s35 = smul.u32 2, %s34
  $region9: #{iou_loss_2d_dice_3d_reg.1} parent=0 // pred_fallthru
    _
  // Predicated region
  $region10: #{iou_loss_2d_dice_3d_reg.1} parent=0 // pred_check
    _
  $region11: #{iou_loss_2d_dice_3d_reg.1} parent=0 // pred_check_branch
    %37 = sbr.rel (0) target = $region13
  $region12: #{iou_loss_2d_dice_3d_reg.1} parent=0 // pred_region
    %s38 = sadd.s32 0, 0
    %p39 = scmp.lt.s32.totalorder %s38, 0
    %s40 = scalar_select %p39, %s38, 0
    %s41 = smul.u32 2, %s40
    %p42 = scmp.lt.s32.totalorder %s41, 1
    %s43 = scalar_select %p42, %s41, 1
    %s44 = smul.addr %s43, 8
    %s45 = scalar_lea.vmem %s2, %s44
    %s46 = sadd.s32 0, 0
    %p47 = scmp.lt.s32.totalorder %s46, 0
    %s48 = scalar_select %p47, %s46, 0
    %s49 = smul.u32 2, %s48
  $region13: #{iou_loss_2d_dice_3d_reg.1} parent=0 // pred_fallthru
    _
  %s50 = sadd.s32 0, 0
  %p51 = scmp.lt.s32.totalorder %s50, 0
  %s52 = scalar_select %p51, %s50, 0
  %s53 = smul.u32 2, %s52
  %p54 = scmp.lt.s32.totalorder %s53, 1
  %s55 = scalar_select %p54, %s53, 1
  %s56 = smul.addr %s55, 8
  %s57 = scalar_lea.vmem %s0, %s56
  %s58 = sadd.s32 0, 0
  %p59 = scmp.lt.s32.totalorder %s58, 0
  %s60 = scalar_select %p59, %s58, 0
  %s61 = smul.u32 2, %s60
  %p62 = scmp.lt.s32.totalorder %s61, 1
  %s63 = scalar_select %p62, %s61, 1
  %s64 = smul.addr %s63, 8
  %s65 = scalar_lea.vmem %s1, %s64
  %s66 = sadd.s32 0, 0
  %p67 = scmp.lt.s32.totalorder %s66, 0
  %s68 = scalar_select %p67, %s66, 0
  %s69 = smul.u32 2, %s68
  %p70 = scmp.lt.s32.totalorder %s69, 1
  %s71 = scalar_select %p70, %s69, 1
  %s72 = smul.addr %s71, 8
  %s73 = scalar_lea.vmem %s2, %s72
  %s74 = sadd.s32 0, 0
  %p75 = scmp.lt.s32.totalorder %s74, 0
  %s76 = scalar_select %p75, %s74, 0
  %s77 = smul.u32 2, %s76
  %p78 = scmp.lt.s32.totalorder %s77, 1
  %s79 = scalar_select %p78, %s77, 1
  %s80 = smul.addr %s79, 8
  %s81 = scalar_lea.vmem %s0, %s80
  %s82 = sadd.s32 0, 0
  %p83 = scmp.lt.s32.totalorder %s82, 0
  %s84 = scalar_select %p83, %s82, 0
  %s85 = smul.u32 2, %s84
  %s86 = sadd.s32 0, 0
  %p87 = scmp.lt.s32.totalorder %s86, 0
  %s88 = scalar_select %p87, %s86, 0
  %s89 = smul.u32 2, %s88
  %p90 = scmp.lt.s32.totalorder %s89, 1
  %s91 = scalar_select %p90, %s89, 1
  %s92 = smul.addr %s91, 8
  %s93 = scalar_lea.vmem %s1, %s92
  %s94 = sadd.s32 0, 0
  %p95 = scmp.lt.s32.totalorder %s94, 0
  %s96 = scalar_select %p95, %s94, 0
  %s97 = smul.u32 2, %s96
  %s98 = sadd.s32 0, 0
  %p99 = scmp.lt.s32.totalorder %s98, 0
  %s100 = scalar_select %p99, %s98, 0
  %s101 = smul.u32 2, %s100
  %p102 = scmp.lt.s32.totalorder %s101, 1
  %s103 = scalar_select %p102, %s101, 1
  %s104 = smul.addr %s103, 8
  %s105 = scalar_lea.vmem %s2, %s104
  %s106 = sadd.s32 0, 0
  %p107 = scmp.lt.s32.totalorder %s106, 0
  %s108 = scalar_select %p107, %s106, 0
  %s109 = smul.u32 2, %s108
  %p110 = scmp.eq.s32.totalorder 0, 0
  // Predicated region
  $region14: #{iou_loss_2d_dice_3d_reg.1} parent=0 // pred_check
    %p111 = pneg %p110
  $region15: #{iou_loss_2d_dice_3d_reg.1} parent=0 // pred_check_branch
    %113 = sbr.rel (%p111) target = $region17
  $region16: #{iou_loss_2d_dice_3d_reg.1} parent=0 // pred_region
    %114 = vst [vmem:[%s3] sm:$0xff] 0.0
    %115 = vst [vmem:[%s3 + $0x8] sm:$0xff] 0.0
    %116 = vst [vmem:[%s3 + $0x10] sm:$0xff] 0.0
    %117 = vst [vmem:[%s3 + $0x18] sm:$0xff] 0.0
    %118 = vst [vmem:[%s3 + $0x20] sm:$0xff] 0.0
    %119 = vst [vmem:[%s3 + $0x28] sm:$0xff] 0.0
  $region17: #{iou_loss_2d_dice_3d_reg.1} parent=0 // pred_fallthru
    _
  %s120 = sadd.s32 0, 0
  %s121 = smul.u32 %s120, 16
  %s122 = ssub.s32 16, %s121
  %v123 = vlaneseq
  %v124 = vshrl.u32 %v123, 7
  %v125 = vadd.s32 %v124, 8
  %v126 = vstv %s122
  %vm127 = vcmp.lt.s32.totalorder %v124, %v126
  %vm128 = vcmp.lt.s32.totalorder %v125, %v126
  %v129 = vld [vmem:[%s81] sm:$0xff]
  %v130 = vld [vmem:[%s81 + $0x8] sm:$0xff]
  %v131 = vsel %vm127, %v129, 0.0
  %v132 = vsel %vm128, %v130, 0.0
  %v133 = vld [vmem:[%s93] sm:$0xff]
  %v134 = vld [vmem:[%s93 + $0x8] sm:$0xff]
  %v135 = vsel %vm127, %v133, 0.0
  %v136 = vsel %vm128, %v134, 0.0
  %v137 = vld [vmem:[%s105] sm:$0xff]
  %v138 = vld [vmem:[%s105 + $0x8] sm:$0xff]
  %v139 = vsel %vm127, %v137, 0.0
  %v140 = vsel %vm128, %v138, 0.0
  %v141 = vmul.f32 %v131, %v135
  %v142 = vmul.f32 %v132, %v136
  %v143 = vlog2.pop %v141
  %v144 = vmul.f32 %v143, 0.6931472
  %v145 = vlog2.pop %v142
  %v146 = vmul.f32 %v145, 0.6931472
  %v147 = vmax.f32 %v144, -100.0
  %v148 = vmax.f32 %v146, -100.0
  %v149 = vsub.f32 1.0, %v141
  %v150 = vsub.f32 1.0, %v142
  %v151 = vlog2.pop %v149
  %v152 = vmul.f32 %v151, 0.6931472
  %v153 = vlog2.pop %v150
  %v154 = vmul.f32 %v153, 0.6931472
  %v155 = vmax.f32 %v152, -100.0
  %v156 = vmax.f32 %v154, -100.0
  %v157 = vmul.f32 %v135, %v147
  %v158 = vmul.f32 %v136, %v148
  %v159 = vsub.f32 1.0, %v135
  %v160 = vsub.f32 1.0, %v136
  %v161 = vmul.f32 %v159, %v155
  %v162 = vmul.f32 %v160, %v156
  %v163 = vadd.f32 %v157, %v161
  %v164 = vadd.f32 %v158, %v162
  %v165 = vsub.f32 0.0, %v163
  %v166 = vsub.f32 0.0, %v164
  %v167 = vmul.f32 %v141, %v139
  %v168 = vmul.f32 %v142, %v140
  %v169 = vadd.f32 %v131, %v135
  %v170 = vadd.f32 %v132, %v136
  %v171 = vmul.f32 %v169, %v139
  %v172 = vmul.f32 %v170, %v140
  %v173 = vld [vmem:[%s3] sm:$0xff]
  %v174 = vadd.f32 %v141, %v142
  %v175 = vadd.f32 %v173, %v174
  %176 = vst [vmem:[%s3] sm:$0xff] %v175
  %s177 = scalar_lea.vmem %s3, 8
  %v178 = vld [vmem:[%s177] sm:$0xff]
  %v179 = vadd.f32 %v131, %v132
  %v180 = vadd.f32 %v178, %v179
  %181 = vst [vmem:[%s177] sm:$0xff] %v180
  %s182 = scalar_lea.vmem %s3, 16
  %v183 = vld [vmem:[%s182] sm:$0xff]
  %v184 = vadd.f32 %v135, %v136
  %v185 = vadd.f32 %v183, %v184
  %186 = vst [vmem:[%s182] sm:$0xff] %v185
  %s187 = scalar_lea.vmem %s3, 24
  %v188 = vld [vmem:[%s187] sm:$0xff]
  %v189 = vadd.f32 %v167, %v168
  %v190 = vadd.f32 %v188, %v189
  %191 = vst [vmem:[%s187] sm:$0xff] %v190
  %s192 = scalar_lea.vmem %s3, 32
  %v193 = vld [vmem:[%s192] sm:$0xff]
  %v194 = vadd.f32 %v171, %v172
  %v195 = vadd.f32 %v193, %v194
  %196 = vst [vmem:[%s192] sm:$0xff] %v195
  %s197 = scalar_lea.vmem %s3, 40
  %v198 = vld [vmem:[%s197] sm:$0xff]
  %v199 = vadd.f32 %v165, %v166
  %v200 = vadd.f32 %v198, %v199
  %201 = vst [vmem:[%s197] sm:$0xff] %v200
  // Predicated region
  $region18: #{iou_loss_2d_dice_3d_reg.1} parent=0 // pred_check
    _
  $region19: #{iou_loss_2d_dice_3d_reg.1} parent=0 // pred_check_branch
    %203 = sbr.rel (0) target = $region21
  $region20: #{iou_loss_2d_dice_3d_reg.1} parent=0 // pred_region
    _
  $region21: #{iou_loss_2d_dice_3d_reg.1} parent=0 // pred_fallthru
    _
  // Predicated region
  $region22: #{iou_loss_2d_dice_3d_reg.1} parent=0 // pred_check
    _
  $region23: #{iou_loss_2d_dice_3d_reg.1} parent=0 // pred_check_branch
    %205 = sbr.rel (0) target = $region25
  $region24: #{iou_loss_2d_dice_3d_reg.1} parent=0 // pred_region
    _
  $region25: #{iou_loss_2d_dice_3d_reg.1} parent=0 // pred_fallthru
    _

</llo_original>
